<compile_context>
chip_gen: v5e
topology: v5e:2x2
jax: 0.10.0
libtpu: 0.0.40
codegen_flags: <defaults>
</compile_context>

<pallas_src>
import jax
import jax.numpy as jnp
from jax.experimental import pallas as pl
from jax.experimental.pallas import tpu as pltpu

IN_FEATURES = 784
HIDDEN = 64


def autoencoder_kernel(x_ref, w1_ref, b1_ref, w2_ref, b2_ref, o_ref):
    # x tile: (TB, 784); weights are bf16 and VMEM-resident (constant index_map).
    x = x_ref[...].astype(jnp.bfloat16)                               # (TB, 784) bf16
    h = jnp.dot(x, w1_ref[...], preferred_element_type=jnp.float32)   # bf16 x bf16 -> f32
    h = jnp.maximum(h + b1_ref[...], 0.0)                             # (TB, 64) f32

    y = jnp.dot(h.astype(jnp.bfloat16), w2_ref[...],
                preferred_element_type=jnp.float32) + b2_ref[...]     # (TB, 784) f32

    # Row-wise softmax in f32 (PyTorch Softmax(dim=None) resolves to dim=1 for 2-D).
    # Padded rows of a ragged last batch tile run softmax on undefined data; those
    # rows are dropped on writeback, so any inf/nan there is benign.
    m = jnp.max(y, axis=-1, keepdims=True)
    e = jnp.exp(y - m)
    denom = jnp.sum(e, axis=-1, keepdims=True)
    o_ref[...] = (e * pl.reciprocal(denom, approx=False)).astype(o_ref.dtype)


def prepare_params(w1, b1, w2, b2):
    """One-time conversion from PyTorch Linear layout to the kernel layout.

    w1: (64, 784), b1: (64,), w2: (784, 64), b2: (784,)  (PyTorch stores (out, in)).
    Returns weights transposed to (in, out) and stored in bf16 (MXU-native operand
    dtype), biases as (1, N) f32.  Do this once at init — NOT per forward call.
    """
    w1_t = jnp.asarray(w1, jnp.float32).T.astype(jnp.bfloat16)   # (784, 64)
    w2_t = jnp.asarray(w2, jnp.float32).T.astype(jnp.bfloat16)   # (64, 784)
    b1_2d = jnp.asarray(b1, jnp.float32).reshape(1, HIDDEN)
    b2_2d = jnp.asarray(b2, jnp.float32).reshape(1, IN_FEATURES)
    return w1_t, b1_2d, w2_t, b2_2d


def _pick_batch_tile(B):
    """Batch tile: >=2 grid steps when possible (megacore), capped for VMEM."""
    TB_CAP = 1024  # ~13 MiB double-buffered f32 x+out: safe on v7x's 32 MiB scoped VMEM
    if B <= 8:
        return B                      # can't split below the 8-row sublane granule
    half = pl.cdiv(B, 2)
    return min(TB_CAP, ((half + 7) // 8) * 8)


def _vmem_limit_bytes(TB, x_itemsize, out_itemsize):
    # Double-buffered x/out tiles + resident bf16 weights/biases, plus headroom
    # for compiler-internal scratch.  Explicit so TB > 512 stays safe on v5e's
    # 16 MiB scoped default and well under v7x's 32 MiB / 64 MiB physical.
    x_bytes = TB * IN_FEATURES * x_itemsize
    out_bytes = TB * IN_FEATURES * out_itemsize
    w_bytes = 2 * IN_FEATURES * HIDDEN * 2
    b_bytes = (HIDDEN + IN_FEATURES) * 4
    need = 2 * (x_bytes + out_bytes + w_bytes + b_bytes)
    return int(need * 1.25) + (4 << 20)


def onesingle_forward(x, params, out_dtype=jnp.float32):
    """x: (B, 784) f32 or bf16. params: output of prepare_params."""
    w1_t, b1_2d, w2_t, b2_2d = params
    B = x.shape[0]

    TB = _pick_batch_tile(B)
    grid = (pl.cdiv(B, TB),)

    x_itemsize = jnp.dtype(x.dtype).itemsize
    out_itemsize = jnp.dtype(out_dtype).itemsize
    cost = pl.CostEstimate(
        flops=4 * B * IN_FEATURES * HIDDEN,
        transcendentals=B * IN_FEATURES + B,
        bytes_accessed=(B * IN_FEATURES * (x_itemsize + out_itemsize)   # x + out
                        + 2 * IN_FEATURES * HIDDEN * 2                  # bf16 weights
                        + (HIDDEN + IN_FEATURES) * 4),                  # biases
    )

    return pl.pallas_call(
        autoencoder_kernel,
        out_shape=jax.ShapeDtypeStruct((B, IN_FEATURES), out_dtype),
        grid_spec=pltpu.PrefetchScalarGridSpec(
            num_scalar_prefetch=0,
            grid=grid,
            in_specs=[
                # x: tiled over batch (double-buffered by the pipeline).
                pl.BlockSpec((TB, IN_FEATURES), lambda i: (i, 0)),
                # Weights / biases: constant index map -> fetched once, VMEM-resident.
                pl.BlockSpec((IN_FEATURES, HIDDEN), lambda i: (0, 0)),
                pl.BlockSpec((1, HIDDEN), lambda i: (0, 0)),
                pl.BlockSpec((HIDDEN, IN_FEATURES), lambda i: (0, 0)),
                pl.BlockSpec((1, IN_FEATURES), lambda i: (0, 0)),
            ],
            out_specs=pl.BlockSpec((TB, IN_FEATURES), lambda i: (i, 0)),
        ),
        compiler_params=pltpu.CompilerParams(
            dimension_semantics=("parallel",),   # independent batch tiles -> megacore
            vmem_limit_bytes=_vmem_limit_bytes(TB, x_itemsize, out_itemsize),
        ),
        cost_estimate=cost,
    )(x, w1_t, b1_2d, w2_t, b2_2d)


def init_params(key):
    """Deterministic PyTorch-style Linear init: U(-1/sqrt(fan_in), 1/sqrt(fan_in))."""
    k1, k2, k3, k4 = jax.random.split(key, 4)
    bound1 = 1.0 / (IN_FEATURES ** 0.5)
    bound2 = 1.0 / (HIDDEN ** 0.5)
    w1 = jax.random.uniform(k1, (HIDDEN, IN_FEATURES), jnp.float32, -bound1, bound1)
    b1 = jax.random.uniform(k2, (HIDDEN,), jnp.float32, -bound1, bound1)
    w2 = jax.random.uniform(k3, (IN_FEATURES, HIDDEN), jnp.float32, -bound2, bound2)
    b2 = jax.random.uniform(k4, (IN_FEATURES,), jnp.float32, -bound2, bound2)
    return w1, b1, w2, b2


if __name__ == "__main__":
    key = jax.random.PRNGKey(0)
    k_x, k_p = jax.random.split(key)
    B = 16                                       # > 8 so the grid has 2 parallel tiles
    x = jax.random.uniform(k_x, (B, IN_FEATURES), jnp.float32)  # MNIST-like flattened input
    w1, b1, w2, b2 = init_params(k_p)

    params = prepare_params(w1, b1, w2, b2)      # one-time layout/dtype prep
    fwd = jax.jit(onesingle_forward)
    out = jax.block_until_ready(fwd(x, params))

    # Reference with the same operand dtypes the kernel feeds the MXU
    # (bf16 operands, f32 accumulation, f32 softmax).
    w1_b, b1_2d, w2_b, b2_2d = params
    xb = x.astype(jnp.bfloat16)
    h_ref = jnp.maximum(
        jnp.dot(xb, w1_b, preferred_element_type=jnp.float32) + b1_2d, 0.0)
    y_ref = jnp.dot(h_ref.astype(jnp.bfloat16), w2_b,
                    preferred_element_type=jnp.float32) + b2_2d
    ref = jax.nn.softmax(y_ref, axis=-1)

    assert out.shape == (B, IN_FEATURES)
    assert out.dtype == jnp.float32
    assert jnp.allclose(out, ref, atol=1e-4, rtol=1e-3)
    assert jnp.allclose(jnp.sum(out, axis=-1), 1.0, atol=1e-4)

    print("KERNEL_OK")
</pallas_src>

<mosaic_0001>
module attributes {stable_mosaic.version = 11 : i64} {
  func.func @autoencoder_kernel(%arg0: i32, %arg1: memref<8x784xf32, #tpu.memory_space<vmem>>, %arg2: memref<784x64xbf16, #tpu.memory_space<vmem>>, %arg3: memref<1x64xf32, #tpu.memory_space<vmem>>, %arg4: memref<64x784xbf16, #tpu.memory_space<vmem>>, %arg5: memref<1x784xf32, #tpu.memory_space<vmem>>, %arg6: memref<8x784xf32, #tpu.memory_space<vmem>>) attributes {dimension_semantics = [#tpu.dimension_semantics<parallel>], iteration_bounds = array<i64: 2>, scalar_prefetch = 0 : i64, scratch_operands = 0 : i64, tpu.core_type = #tpu.core_type<tc>, window_params = [{transform_indices = @transform_0, window_bounds = array<i64: 8, 784>}, {pipeline_mode = #tpu.pipeline_mode<synchronous>, transform_indices = @transform_1, window_bounds = array<i64: 784, 64>}, {pipeline_mode = #tpu.pipeline_mode<synchronous>, transform_indices = @transform_2, window_bounds = array<i64: 1, 64>}, {pipeline_mode = #tpu.pipeline_mode<synchronous>, transform_indices = @transform_3, window_bounds = array<i64: 64, 784>}, {pipeline_mode = #tpu.pipeline_mode<synchronous>, transform_indices = @transform_4, window_bounds = array<i64: 1, 784>}, {transform_indices = @transform_5, window_bounds = array<i64: 8, 784>}]} {
    %c0 = arith.constant 0 : index
    %c0_0 = arith.constant 0 : index
    %0 = vector.load %arg1[%c0, %c0_0] : memref<8x784xf32, #tpu.memory_space<vmem>>, vector<8x784xf32>
    %1 = arith.truncf %0 : vector<8x784xf32> to vector<8x784xbf16>
    %c0_1 = arith.constant 0 : index
    %c0_2 = arith.constant 0 : index
    %2 = vector.load %arg2[%c0_1, %c0_2] : memref<784x64xbf16, #tpu.memory_space<vmem>>, vector<784x64xbf16>
    %cst = arith.constant dense<0.000000e+00> : vector<8x64xf32>
    %3 = tpu.matmul %1, %2, %cst {dimension_numbers = #tpu.dot_dimension_numbers<[1], [0], [0], [1], [0, 0, 1, 1], [], []>} : vector<8x784xbf16>, vector<784x64xbf16>, vector<8x64xf32> -> vector<8x64xf32>
    %c0_3 = arith.constant 0 : index
    %c0_4 = arith.constant 0 : index
    %4 = vector.load %arg3[%c0_3, %c0_4] : memref<1x64xf32, #tpu.memory_space<vmem>>, vector<1x64xf32>
    %5 = vector.broadcast %4 : vector<1x64xf32> to vector<8x64xf32>
    %6 = arith.addf %3, %5 : vector<8x64xf32>
    %cst_5 = arith.constant 0.000000e+00 : f32
    %7 = vector.broadcast %cst_5 : f32 to vector<8x64xf32>
    %8 = arith.maximumf %6, %7 : vector<8x64xf32>
    %9 = arith.truncf %8 : vector<8x64xf32> to vector<8x64xbf16>
    %c0_6 = arith.constant 0 : index
    %c0_7 = arith.constant 0 : index
    %10 = vector.load %arg4[%c0_6, %c0_7] : memref<64x784xbf16, #tpu.memory_space<vmem>>, vector<64x784xbf16>
    %cst_8 = arith.constant dense<0.000000e+00> : vector<8x784xf32>
    %11 = tpu.matmul %9, %10, %cst_8 {dimension_numbers = #tpu.dot_dimension_numbers<[1], [0], [0], [1], [0, 0, 1, 1], [], []>} : vector<8x64xbf16>, vector<64x784xbf16>, vector<8x784xf32> -> vector<8x784xf32>
    %c0_9 = arith.constant 0 : index
    %c0_10 = arith.constant 0 : index
    %12 = vector.load %arg5[%c0_9, %c0_10] : memref<1x784xf32, #tpu.memory_space<vmem>>, vector<1x784xf32>
    %13 = vector.broadcast %12 : vector<1x784xf32> to vector<8x784xf32>
    %14 = arith.addf %11, %13 : vector<8x784xf32>
    %cst_11 = arith.constant dense<0xFF800000> : vector<8xf32>
    %15 = vector.multi_reduction <maximumf>, %14, %cst_11 [1] : vector<8x784xf32> to vector<8xf32>
    %16 = vector.shape_cast %15 : vector<8xf32> to vector<8x1xf32>
    %17 = vector.broadcast %16 : vector<8x1xf32> to vector<8x784xf32>
    %18 = arith.subf %14, %17 : vector<8x784xf32>
    %19 = math.exp %18 : vector<8x784xf32>
    %cst_12 = arith.constant dense<0.000000e+00> : vector<8xf32>
    %20 = vector.multi_reduction <add>, %19, %cst_12 [1] : vector<8x784xf32> to vector<8xf32>
    %21 = vector.shape_cast %20 : vector<8xf32> to vector<8x1xf32>
    %22 = tpu.reciprocal %21 : vector<8x1xf32> -> vector<8x1xf32>
    %23 = vector.broadcast %22 : vector<8x1xf32> to vector<8x784xf32>
    %24 = arith.mulf %19, %23 : vector<8x784xf32>
    %c0_13 = arith.constant 0 : index
    %c0_14 = arith.constant 0 : index
    %25 = vector.load %arg6[%c0_13, %c0_14] : memref<8x784xf32, #tpu.memory_space<vmem>>, vector<8x784xf32>
    tpu.vector_store %arg6[%c0_13, %c0_14], %24 {strides = array<i32>} : memref<8x784xf32, #tpu.memory_space<vmem>>, vector<8x784xf32>,
    return
  }
  func.func @transform_0(%arg0: i32) -> (i32, i32) {
    %c0_i32 = arith.constant 0 : i32
    %c0_i32_0 = arith.constant 0 : i32
    return %arg0, %c0_i32 : i32, i32
  }
  func.func @transform_1(%arg0: i32) -> (i32, i32) {
    %c0_i32 = arith.constant 0 : i32
    %c0_i32_0 = arith.constant 0 : i32
    %c0_i32_1 = arith.constant 0 : i32
    return %c0_i32, %c0_i32_0 : i32, i32
  }
  func.func @transform_2(%arg0: i32) -> (i32, i32) {
    %c0_i32 = arith.constant 0 : i32
    %c0_i32_0 = arith.constant 0 : i32
    %c0_i32_1 = arith.constant 0 : i32
    return %c0_i32, %c0_i32_0 : i32, i32
  }
  func.func @transform_3(%arg0: i32) -> (i32, i32) {
    %c0_i32 = arith.constant 0 : i32
    %c0_i32_0 = arith.constant 0 : i32
    %c0_i32_1 = arith.constant 0 : i32
    return %c0_i32, %c0_i32_0 : i32, i32
  }
  func.func @transform_4(%arg0: i32) -> (i32, i32) {
    %c0_i32 = arith.constant 0 : i32
    %c0_i32_0 = arith.constant 0 : i32
    %c0_i32_1 = arith.constant 0 : i32
    return %c0_i32, %c0_i32_0 : i32, i32
  }
  func.func @transform_5(%arg0: i32) -> (i32, i32) {
    %c0_i32 = arith.constant 0 : i32
    %c0_i32_0 = arith.constant 0 : i32
    return %arg0, %c0_i32 : i32, i32
  }
}

</mosaic_0001>

<llo_original>
// kernel: onesingle_forward.1
$region0: #{onesingle_forward.1}
  #allocation0 [shape = 'u32[]', space=smem, size = 0x4, offset = 0x4, fixed_abs, tag = 'smem constant byte address 0x4 - core index']
  #allocation1 [shape = 'u32[72,128]{1,0:T(1,128)}', space=vmem, size = 0x9000, scoped, tag = 'internal scratch']
  %s0 = inlined_call_operand.vmem [shape: f32[16,784], index: 0, kind: input, shape index: {}]
  %s1 = inlined_call_operand.vmem [shape: bf16[784,64], index: 1, kind: input, shape index: {}]
  %s2 = inlined_call_operand.vmem [shape: f32[1,64], index: 2, kind: input, shape index: {}]
  %s3 = inlined_call_operand.vmem [shape: bf16[64,784], index: 3, kind: input, shape index: {}]
  %s4 = inlined_call_operand.vmem [shape: f32[1,784], index: 4, kind: input, shape index: {}]
  %s5 = inlined_call_operand.hbm [shape: f32[16,784], index: 5, kind: output, shape index: {}]
  %s6 = sld [smem:[#allocation0]]
  $region53: #{onesingle_forward.1} parent=0
    _
  %s8 = ssub.s32 1, %s6
  %s9 = scalar_select 0, %s8, %s6
  $region1: #{onesingle_forward.1} parent=0
    #allocation2 [shape = 'u8[57344]{0}', space=vmem, size = 0xe000, scoped, tag = 'output window, operand 0']
    #allocation3 [shape = 's32[2]{0}', space=sflag, size = 0x8, scoped, tag = 'scoped memory for onesingle_forward.1']
    %10 = vsyncpa [#allocation3], 0
    %s11 = scalar_lea.sflag [#allocation3], 1
    %12 = vsyncpa %s11, 0
    loop: start=0, step=1, limit=4
    $region2: #{onesingle_forward.1} parent=1 // loop_pre_header
      _
    $region3: #{onesingle_forward.1} parent=1 // loop_header
      %s14 = sphi 0, %s18
      %p15 = scmp.ge.s32.totalorder %s14, 4
      %s24 = sphi 0, %s26
      %s27 = sphi 0, %s24
      %s28 = sphi 0, %s27
      %s44 = sphi 0, %s28
      %s48 = sphi 0, %s48
      %s50 = sphi 0, %s48
      %s51 = sphi 0, %s50
      %s65 = sphi 0, %s51
      %s69 = sphi 0, %s69
      %s71 = sphi 0, %s69
      %s72 = sphi 0, %s71
      %s86 = sphi 0, %s72
      %s90 = sphi 0, %s90
      %s92 = sphi 0, %s90
      %s93 = sphi 0, %s92
      %s107 = sphi 0, %s93
      %s111 = sphi 0, %s111
      %s113 = sphi 0, %s111
      %s114 = sphi 0, %s113
      %s128 = sphi 0, %s114
      %s134 = sphi 0, %s136
      %s137 = sphi 0, %s134
      %s138 = sphi 0, %s137
      %s154 = sphi 0, %s138
    $region4: #{onesingle_forward.1} parent=1 // loop_header_branch
      %17 = sbr.rel (%p15) target = $region8
    $region5: #{onesingle_forward.1} parent=1 // loop_body
      %s19 = ssub.s32 %s14, 1
      %s20 = ssub.s32 %s14, 2
      %s21 = sadd.s32 %s14, 1
      %s22 = ssub.s32 %s14, %s21
      %p23 = scmp.eq.s32.totalorder %s22, 0
      %s25 = sadd.s32 %s24, 1
      %s26 = scalar_select %p23, %s24, %s25
      %p29 = pneg %p23
      %p30 = scmp.eq.s32.totalorder %s14, 1
      %p31 = por %p29, %p30
      %p32 = scmp.ne.s32.totalorder %s24, %s27
      %p33 = scmp.eq.s32.totalorder %s14, 0
      %p34 = por %p32, %p33
      %p35 = scmp.ne.s32.totalorder %s24, %s27
      %p36 = scmp.eq.s32.totalorder %s19, 1
      %p37 = por %p35, %p36
      %p38 = scmp.ne.s32.totalorder %s27, %s28
      %p39 = scmp.eq.s32.totalorder %s19, 0
      %p40 = por %p38, %p39
      %p41 = scmp.ne.s32.totalorder %s27, %s28
      %p42 = scmp.eq.s32.totalorder %s20, 1
      %p43 = por %p41, %p42
      %p45 = scmp.ne.s32.totalorder %s28, %s44
      %p46 = scmp.eq.s32.totalorder %s20, 0
      %p47 = por %p45, %p46
      %s49 = sadd.s32 %s48, 1
      %p52 = scmp.eq.s32.totalorder %s14, 1
      %p53 = scmp.ne.s32.totalorder %s48, %s50
      %p54 = scmp.eq.s32.totalorder %s14, 0
      %p55 = por %p53, %p54
      %p56 = scmp.ne.s32.totalorder %s48, %s50
      %p57 = scmp.eq.s32.totalorder %s19, 1
      %p58 = por %p56, %p57
      %p59 = scmp.ne.s32.totalorder %s50, %s51
      %p60 = scmp.eq.s32.totalorder %s19, 0
      %p61 = por %p59, %p60
      %p62 = scmp.ne.s32.totalorder %s50, %s51
      %p63 = scmp.eq.s32.totalorder %s20, 1
      %p64 = por %p62, %p63
      %p66 = scmp.ne.s32.totalorder %s51, %s65
      %p67 = scmp.eq.s32.totalorder %s20, 0
      %p68 = por %p66, %p67
      %s70 = sadd.s32 %s69, 1
      %p73 = scmp.eq.s32.totalorder %s14, 1
      %p74 = scmp.ne.s32.totalorder %s69, %s71
      %p75 = scmp.eq.s32.totalorder %s14, 0
      %p76 = por %p74, %p75
      %p77 = scmp.ne.s32.totalorder %s69, %s71
      %p78 = scmp.eq.s32.totalorder %s19, 1
      %p79 = por %p77, %p78
      %p80 = scmp.ne.s32.totalorder %s71, %s72
      %p81 = scmp.eq.s32.totalorder %s19, 0
      %p82 = por %p80, %p81
      %p83 = scmp.ne.s32.totalorder %s71, %s72
      %p84 = scmp.eq.s32.totalorder %s20, 1
      %p85 = por %p83, %p84
      %p87 = scmp.ne.s32.totalorder %s72, %s86
      %p88 = scmp.eq.s32.totalorder %s20, 0
      %p89 = por %p87, %p88
      %s91 = sadd.s32 %s90, 1
      %p94 = scmp.eq.s32.totalorder %s14, 1
      %p95 = scmp.ne.s32.totalorder %s90, %s92
      %p96 = scmp.eq.s32.totalorder %s14, 0
      %p97 = por %p95, %p96
      %p98 = scmp.ne.s32.totalorder %s90, %s92
      %p99 = scmp.eq.s32.totalorder %s19, 1
      %p100 = por %p98, %p99
      %p101 = scmp.ne.s32.totalorder %s92, %s93
      %p102 = scmp.eq.s32.totalorder %s19, 0
      %p103 = por %p101, %p102
      %p104 = scmp.ne.s32.totalorder %s92, %s93
      %p105 = scmp.eq.s32.totalorder %s20, 1
      %p106 = por %p104, %p105
      %p108 = scmp.ne.s32.totalorder %s93, %s107
      %p109 = scmp.eq.s32.totalorder %s20, 0
      %p110 = por %p108, %p109
      %s112 = sadd.s32 %s111, 1
      %p115 = scmp.eq.s32.totalorder %s14, 1
      %p116 = scmp.ne.s32.totalorder %s111, %s113
      %p117 = scmp.eq.s32.totalorder %s14, 0
      %p118 = por %p116, %p117
      %p119 = scmp.ne.s32.totalorder %s111, %s113
      %p120 = scmp.eq.s32.totalorder %s19, 1
      %p121 = por %p119, %p120
      %p122 = scmp.ne.s32.totalorder %s113, %s114
      %p123 = scmp.eq.s32.totalorder %s19, 0
      %p124 = por %p122, %p123
      %p125 = scmp.ne.s32.totalorder %s113, %s114
      %p126 = scmp.eq.s32.totalorder %s20, 1
      %p127 = por %p125, %p126
      %p129 = scmp.ne.s32.totalorder %s114, %s128
      %p130 = scmp.eq.s32.totalorder %s20, 0
      %p131 = por %p129, %p130
      %s132 = ssub.s32 %s14, %s21
      %p133 = scmp.eq.s32.totalorder %s132, 0
      %s135 = sadd.s32 %s134, 1
      %s136 = scalar_select %p133, %s134, %s135
      %p139 = pneg %p133
      %p140 = scmp.eq.s32.totalorder %s14, 1
      %p141 = por %p139, %p140
      %p142 = scmp.ne.s32.totalorder %s134, %s137
      %p143 = scmp.eq.s32.totalorder %s14, 0
      %p144 = por %p142, %p143
      %p145 = scmp.ne.s32.totalorder %s134, %s137
      %p146 = scmp.eq.s32.totalorder %s19, 1
      %p147 = por %p145, %p146
      %p148 = scmp.ne.s32.totalorder %s137, %s138
      %p149 = scmp.eq.s32.totalorder %s19, 0
      %p150 = por %p148, %p149
      %p151 = scmp.ne.s32.totalorder %s137, %s138
      %p152 = scmp.eq.s32.totalorder %s20, 1
      %p153 = por %p151, %p152
      %p155 = scmp.ne.s32.totalorder %s138, %s154
      %p156 = scmp.eq.s32.totalorder %s20, 0
      %p157 = por %p155, %p156
      %p158 = scmp.le.s32.totalorder 1, %s14
      %p159 = scmp.lt.s32.totalorder %s14, 3
      %p160 = pnand %p158, %p159
      %p161 = pneg %p160
      // Predicated region
      $region9: #{onesingle_forward.1} parent=5 // pred_check
        _
      $region10: #{onesingle_forward.1} parent=5 // pred_check_branch
        %163 = sbr.rel (%p160) target = $region12
      $region11: #{onesingle_forward.1} parent=5 // pred_region
        %s164 = ssub.s32 %s14, 1
        // Predicated region
        $region13: #{onesingle_forward.1} parent=11 // pred_check
          %p165 = pneg %p61
        $region14: #{onesingle_forward.1} parent=11 // pred_check_branch
          %167 = sbr.rel (%p165) target = $region16
        $region15: #{onesingle_forward.1} parent=11 // pred_region
          _
        $region16: #{onesingle_forward.1} parent=11 // pred_fallthru
          _
        // Predicated region
        $region17: #{onesingle_forward.1} parent=11 // pred_check
          %p168 = pneg %p82
        $region18: #{onesingle_forward.1} parent=11 // pred_check_branch
          %170 = sbr.rel (%p168) target = $region20
        $region19: #{onesingle_forward.1} parent=11 // pred_region
          _
        $region20: #{onesingle_forward.1} parent=11 // pred_fallthru
          _
        // Predicated region
        $region21: #{onesingle_forward.1} parent=11 // pred_check
          %p171 = pneg %p103
        $region22: #{onesingle_forward.1} parent=11 // pred_check_branch
          %173 = sbr.rel (%p171) target = $region24
        $region23: #{onesingle_forward.1} parent=11 // pred_region
          _
        $region24: #{onesingle_forward.1} parent=11 // pred_fallthru
          _
        // Predicated region
        $region25: #{onesingle_forward.1} parent=11 // pred_check
          %p174 = pneg %p124
        $region26: #{onesingle_forward.1} parent=11 // pred_check_branch
          %176 = sbr.rel (%p174) target = $region28
        $region27: #{onesingle_forward.1} parent=11 // pred_region
          _
        $region28: #{onesingle_forward.1} parent=11 // pred_fallthru
          _
      $region12: #{onesingle_forward.1} parent=5 // pred_fallthru
        _
      %p177 = scmp.lt.s32.totalorder %s14, 2
      // Predicated region
      $region29: #{onesingle_forward.1} parent=5 // pred_check
        %p178 = pneg %p177
      $region30: #{onesingle_forward.1} parent=5 // pred_check_branch
        %180 = sbr.rel (%p178) target = $region32
      $region31: #{onesingle_forward.1} parent=5 // pred_region
        // Predicated region
        $region33: #{onesingle_forward.1} parent=31 // pred_check
          %p181 = pneg %p34
        $region34: #{onesingle_forward.1} parent=31 // pred_check_branch
          %183 = sbr.rel (%p181) target = $region36
        $region35: #{onesingle_forward.1} parent=31 // pred_region
          %p184 = scmp.lt.s32.totalorder %s14, 1
          %s185 = scalar_select %p184, %s14, 1
          %s186 = smul.addr %s185, 7
          %s187 = smul.addr %s186, 8
          %s188 = scalar_lea.vmem %s0, %s187
        $region36: #{onesingle_forward.1} parent=31 // pred_fallthru
          _
      $region32: #{onesingle_forward.1} parent=5 // pred_fallthru
        _
      %p189 = scmp.le.s32.totalorder 1, %s14
      %p190 = scmp.lt.s32.totalorder %s14, 3
      %p191 = pnand %p189, %p190
      %p192 = pneg %p191
      // Predicated region
      $region37: #{onesingle_forward.1} parent=5 // pred_check
        _
      $region38: #{onesingle_forward.1} parent=5 // pred_check_branch
        %194 = sbr.rel (%p191) target = $region40
      $region39: #{onesingle_forward.1} parent=5 // pred_region
        %s195 = ssub.s32 %s14, 1
        %p196 = scmp.lt.s32.totalorder %s19, 1
        %s197 = scalar_select %p196, %s19, 1
        %s198 = smul.addr %s197, 7
        %s199 = smul.addr %s198, 8
        %s200 = scalar_lea.vmem %s0, %s199
        %p201 = pneg %p40
        %p202 = pneg %p37
        %p203 = pneg %p61
        %p204 = pneg %p58
        %p205 = pneg %p82
        %p206 = pneg %p79
        %p207 = pneg %p103
        %p208 = pneg %p100
        %p209 = pneg %p124
        %p210 = pneg %p121
        %p211 = pneg %p150
        %p212 = pneg %p147
        %s213 = sand.u32 %s137, 1
        %s214 = scalar_lea.sflag [#allocation3], %s213
        %s215 = sand.u32 %s137, 1
        %s216 = smul.addr %s215, 56
        %s217 = scalar_lea.vmem [#allocation2], %s216
        %p218 = scmp.lt.s32.totalorder %s19, 1
        %s219 = scalar_select %p218, %s19, 1
        %s220 = smul.addr %s219, 7
        %s221 = smul.addr %s220, 8
        %s222 = scalar_lea.vmem %s0, %s221
        %v224 = vld [vmem:[%s222] sm:$0xff]
        %v225 = vld [vmem:[%s222 + $0x8] sm:$0xff]
        %v226 = vld [vmem:[%s222 + $0x10] sm:$0xff]
        %v227 = vld [vmem:[%s222 + $0x18] sm:$0xff]
        %v228 = vld [vmem:[%s222 + $0x20] sm:$0xff]
        %v229 = vld [vmem:[%s222 + $0x28] sm:$0xff]
        %v230 = vld [vmem:[%s222 + $0x30] sm:$0xff]
        %v231 = vpack.c.bf16 %v224, %v224
        %v232 = vpack.c.bf16 %v225, %v225
        %v233 = vpack.c.bf16 %v226, %v226
        %v234 = vpack.c.bf16 %v227, %v227
        %v235 = vpack.c.bf16 %v228, %v228
        %v236 = vpack.c.bf16 %v229, %v229
        %v237 = vpack.c.bf16 %v230, %v230
        %v238 = vld [vmem:[%s1] sm:$0xf]
        %v239 = vld [vmem:[%s1 + $0x4] sm:$0xf]
        %v240 = vld [vmem:[%s1 + $0x8] sm:$0xf]
        %v241 = vld [vmem:[%s1 + $0xc] sm:$0xf]
        %v242 = vld [vmem:[%s1 + $0x10] sm:$0xf]
        %v243 = vld [vmem:[%s1 + $0x14] sm:$0xf]
        %v244 = vld [vmem:[%s1 + $0x18] sm:$0xf]
        %v245 = vld [vmem:[%s1 + $0x1c] sm:$0xf]
        %v246 = vld [vmem:[%s1 + $0x20] sm:$0xf]
        %v247 = vld [vmem:[%s1 + $0x24] sm:$0xf]
        %v248 = vld [vmem:[%s1 + $0x28] sm:$0xf]
        %v249 = vld [vmem:[%s1 + $0x2c] sm:$0xf]
        %v250 = vld [vmem:[%s1 + $0x30] sm:$0xf]
        %v251 = vld [vmem:[%s1 + $0x34] sm:$0xf]
        %v252 = vld [vmem:[%s1 + $0x38] sm:$0xf]
        %v253 = vld [vmem:[%s1 + $0x3c] sm:$0xf]
        %v254 = vld [vmem:[%s1 + $0x40] sm:$0xf]
        %v255 = vld [vmem:[%s1 + $0x44] sm:$0xf]
        %v256 = vld [vmem:[%s1 + $0x48] sm:$0xf]
        %v257 = vld [vmem:[%s1 + $0x4c] sm:$0xf]
        %v258 = vld [vmem:[%s1 + $0x50] sm:$0xf]
        %v259 = vld [vmem:[%s1 + $0x54] sm:$0xf]
        %v260 = vld [vmem:[%s1 + $0x58] sm:$0xf]
        %v261 = vld [vmem:[%s1 + $0x5c] sm:$0xf]
        %v262 = vld [vmem:[%s1 + $0x60] sm:$0xf]
        %v263 = vld [vmem:[%s1 + $0x64] sm:$0xf]
        %v264 = vld [vmem:[%s1 + $0x68] sm:$0xf]
        %v265 = vld [vmem:[%s1 + $0x6c] sm:$0xf]
        %v266 = vld [vmem:[%s1 + $0x70] sm:$0xf]
        %v267 = vld [vmem:[%s1 + $0x74] sm:$0xf]
        %v268 = vld [vmem:[%s1 + $0x78] sm:$0xf]
        %v269 = vld [vmem:[%s1 + $0x7c] sm:$0xf]
        %v270 = vld [vmem:[%s1 + $0x80] sm:$0xf]
        %v271 = vld [vmem:[%s1 + $0x84] sm:$0xf]
        %v272 = vld [vmem:[%s1 + $0x88] sm:$0xf]
        %v273 = vld [vmem:[%s1 + $0x8c] sm:$0xf]
        %v274 = vld [vmem:[%s1 + $0x90] sm:$0xf]
        %v275 = vld [vmem:[%s1 + $0x94] sm:$0xf]
        %v276 = vld [vmem:[%s1 + $0x98] sm:$0xf]
        %v277 = vld [vmem:[%s1 + $0x9c] sm:$0xf]
        %v278 = vld [vmem:[%s1 + $0xa0] sm:$0xf]
        %v279 = vld [vmem:[%s1 + $0xa4] sm:$0xf]
        %v280 = vld [vmem:[%s1 + $0xa8] sm:$0xf]
        %v281 = vld [vmem:[%s1 + $0xac] sm:$0xf]
        %v282 = vld [vmem:[%s1 + $0xb0] sm:$0xf]
        %v283 = vld [vmem:[%s1 + $0xb4] sm:$0xf]
        %v284 = vld [vmem:[%s1 + $0xb8] sm:$0xf]
        %v285 = vld [vmem:[%s1 + $0xbc] sm:$0xf]
        %v286 = vld [vmem:[%s1 + $0xc0] sm:$0xf]
        %v287 = vld [vmem:[%s1 + $0xc4] sm:$0xf]
        %v288 = vld [vmem:[%s1 + $0xc8] sm:$0xf]
        %v289 = vld [vmem:[%s1 + $0xcc] sm:$0xf]
        %v290 = vld [vmem:[%s1 + $0xd0] sm:$0xf]
        %v291 = vld [vmem:[%s1 + $0xd4] sm:$0xf]
        %v292 = vld [vmem:[%s1 + $0xd8] sm:$0xf]
        %v293 = vld [vmem:[%s1 + $0xdc] sm:$0xf]
        %v294 = vld [vmem:[%s1 + $0xe0] sm:$0xf]
        %v295 = vld [vmem:[%s1 + $0xe4] sm:$0xf]
        %v296 = vld [vmem:[%s1 + $0xe8] sm:$0xf]
        %v297 = vld [vmem:[%s1 + $0xec] sm:$0xf]
        %v298 = vld [vmem:[%s1 + $0xf0] sm:$0xf]
        %v299 = vld [vmem:[%s1 + $0xf4] sm:$0xf]
        %v300 = vld [vmem:[%s1 + $0xf8] sm:$0xf]
        %v301 = vld [vmem:[%s1 + $0xfc] sm:$0xf]
        %v302 = vld [vmem:[%s1 + $0x100] sm:$0xf]
        %v303 = vld [vmem:[%s1 + $0x104] sm:$0xf]
        %v304 = vld [vmem:[%s1 + $0x108] sm:$0xf]
        %v305 = vld [vmem:[%s1 + $0x10c] sm:$0xf]
        %v306 = vld [vmem:[%s1 + $0x110] sm:$0xf]
        %v307 = vld [vmem:[%s1 + $0x114] sm:$0xf]
        %v308 = vld [vmem:[%s1 + $0x118] sm:$0xf]
        %v309 = vld [vmem:[%s1 + $0x11c] sm:$0xf]
        %v310 = vld [vmem:[%s1 + $0x120] sm:$0xf]
        %v311 = vld [vmem:[%s1 + $0x124] sm:$0xf]
        %v312 = vld [vmem:[%s1 + $0x128] sm:$0xf]
        %v313 = vld [vmem:[%s1 + $0x12c] sm:$0xf]
        %v314 = vld [vmem:[%s1 + $0x130] sm:$0xf]
        %v315 = vld [vmem:[%s1 + $0x134] sm:$0xf]
        %v316 = vld [vmem:[%s1 + $0x138] sm:$0xf]
        %v317 = vld [vmem:[%s1 + $0x13c] sm:$0xf]
        %v318 = vld [vmem:[%s1 + $0x140] sm:$0xf]
        %v319 = vld [vmem:[%s1 + $0x144] sm:$0xf]
        %v320 = vld [vmem:[%s1 + $0x148] sm:$0xf]
        %v321 = vld [vmem:[%s1 + $0x14c] sm:$0xf]
        %v322 = vld [vmem:[%s1 + $0x150] sm:$0xf]
        %v323 = vld [vmem:[%s1 + $0x154] sm:$0xf]
        %v324 = vld [vmem:[%s1 + $0x158] sm:$0xf]
        %v325 = vld [vmem:[%s1 + $0x15c] sm:$0xf]
        %v326 = vld [vmem:[%s1 + $0x160] sm:$0xf]
        %v327 = vld [vmem:[%s1 + $0x164] sm:$0xf]
        %v328 = vld [vmem:[%s1 + $0x168] sm:$0xf]
        %v329 = vld [vmem:[%s1 + $0x16c] sm:$0xf]
        %v330 = vld [vmem:[%s1 + $0x170] sm:$0xf]
        %v331 = vld [vmem:[%s1 + $0x174] sm:$0xf]
        %v332 = vld [vmem:[%s1 + $0x178] sm:$0xf]
        %v333 = vld [vmem:[%s1 + $0x17c] sm:$0xf]
        %v334 = vld [vmem:[%s1 + $0x180] sm:$0xf]
        %v335 = vld [vmem:[%s1 + $0x184] sm:$0xf]
        %v336 = vld [vmem:[%s2] sm:$0x1]
        %v338 = vperm.slane %v336, 0
        %v438 = vunpack.c.l.b16 %v238
        %v439 = vunpack.c.l.b16 %v239
        %v440 = vunpack.c.l.b16 %v240
        %v441 = vunpack.c.l.b16 %v241
        %v442 = vunpack.c.l.b16 %v242
        %v443 = vunpack.c.l.b16 %v243
        %v444 = vunpack.c.l.b16 %v244
        %v445 = vunpack.c.l.b16 %v245
        %v446 = vunpack.c.l.b16 %v246
        %v447 = vunpack.c.l.b16 %v247
        %v448 = vunpack.c.l.b16 %v248
        %v449 = vunpack.c.l.b16 %v249
        %v450 = vunpack.c.l.b16 %v250
        %v451 = vunpack.c.l.b16 %v251
        %v452 = vunpack.c.l.b16 %v252
        %v453 = vunpack.c.l.b16 %v253
        %v454 = vunpack.c.l.b16 %v254
        %v455 = vunpack.c.l.b16 %v255
        %v456 = vunpack.c.l.b16 %v256
        %v457 = vunpack.c.l.b16 %v257
        %v458 = vunpack.c.l.b16 %v258
        %v459 = vunpack.c.l.b16 %v259
        %v460 = vunpack.c.l.b16 %v260
        %v461 = vunpack.c.l.b16 %v261
        %v462 = vunpack.c.l.b16 %v262
        %v463 = vunpack.c.l.b16 %v263
        %v464 = vunpack.c.l.b16 %v264
        %v465 = vunpack.c.l.b16 %v265
        %v466 = vunpack.c.l.b16 %v266
        %v467 = vunpack.c.l.b16 %v267
        %v468 = vunpack.c.l.b16 %v268
        %v469 = vunpack.c.l.b16 %v269
        %v470 = vunpack.c.l.b16 %v270
        %v471 = vunpack.c.l.b16 %v271
        %v472 = vunpack.c.l.b16 %v272
        %v473 = vunpack.c.l.b16 %v273
        %v474 = vunpack.c.l.b16 %v274
        %v475 = vunpack.c.l.b16 %v275
        %v476 = vunpack.c.l.b16 %v276
        %v477 = vunpack.c.l.b16 %v277
        %v478 = vunpack.c.l.b16 %v278
        %v479 = vunpack.c.l.b16 %v279
        %v480 = vunpack.c.l.b16 %v280
        %v481 = vunpack.c.l.b16 %v281
        %v482 = vunpack.c.l.b16 %v282
        %v483 = vunpack.c.l.b16 %v283
        %v484 = vunpack.c.l.b16 %v284
        %v485 = vunpack.c.l.b16 %v285
        %v486 = vunpack.c.l.b16 %v286
        %v487 = vunpack.c.l.b16 %v287
        %v488 = vunpack.c.l.b16 %v288
        %v489 = vunpack.c.l.b16 %v289
        %v490 = vunpack.c.l.b16 %v290
        %v491 = vunpack.c.l.b16 %v291
        %v492 = vunpack.c.l.b16 %v292
        %v493 = vunpack.c.l.b16 %v293
        %v494 = vunpack.c.l.b16 %v294
        %v495 = vunpack.c.l.b16 %v295
        %v496 = vunpack.c.l.b16 %v296
        %v497 = vunpack.c.l.b16 %v297
        %v498 = vunpack.c.l.b16 %v298
        %v499 = vunpack.c.l.b16 %v299
        %v500 = vunpack.c.l.b16 %v300
        %v501 = vunpack.c.l.b16 %v301
        %v502 = vunpack.c.l.b16 %v302
        %v503 = vunpack.c.l.b16 %v303
        %v504 = vunpack.c.l.b16 %v304
        %v505 = vunpack.c.l.b16 %v305
        %v506 = vunpack.c.l.b16 %v306
        %v507 = vunpack.c.l.b16 %v307
        %v508 = vunpack.c.l.b16 %v308
        %v509 = vunpack.c.l.b16 %v309
        %v510 = vunpack.c.l.b16 %v310
        %v511 = vunpack.c.l.b16 %v311
        %v512 = vunpack.c.l.b16 %v312
        %v513 = vunpack.c.l.b16 %v313
        %v514 = vunpack.c.l.b16 %v314
        %v515 = vunpack.c.l.b16 %v315
        %v516 = vunpack.c.l.b16 %v316
        %v517 = vunpack.c.l.b16 %v317
        %v518 = vunpack.c.l.b16 %v318
        %v519 = vunpack.c.l.b16 %v319
        %v520 = vunpack.c.l.b16 %v320
        %v521 = vunpack.c.l.b16 %v321
        %v522 = vunpack.c.l.b16 %v322
        %v523 = vunpack.c.l.b16 %v323
        %v524 = vunpack.c.l.b16 %v324
        %v525 = vunpack.c.l.b16 %v325
        %v526 = vunpack.c.l.b16 %v326
        %v527 = vunpack.c.l.b16 %v327
        %v528 = vunpack.c.l.b16 %v328
        %v529 = vunpack.c.l.b16 %v329
        %v530 = vunpack.c.l.b16 %v330
        %v531 = vunpack.c.l.b16 %v331
        %v532 = vunpack.c.l.b16 %v332
        %v533 = vunpack.c.l.b16 %v333
        %v534 = vunpack.c.l.b16 %v334
        %v535 = vunpack.c.l.b16 %v335
        %v536 = vpack.c.b16 %v439, %v438
        %v537 = vpack.c.b16 %v441, %v440
        %v538 = vpack.c.b16 %v443, %v442
        %v539 = vpack.c.b16 %v445, %v444
        %v540 = vpack.c.b16 %v447, %v446
        %v541 = vpack.c.b16 %v449, %v448
        %v542 = vpack.c.b16 %v451, %v450
        %v543 = vpack.c.b16 %v453, %v452
        %v544 = vpack.c.b16 %v455, %v454
        %v545 = vpack.c.b16 %v457, %v456
        %v546 = vpack.c.b16 %v459, %v458
        %v547 = vpack.c.b16 %v461, %v460
        %v548 = vpack.c.b16 %v463, %v462
        %v549 = vpack.c.b16 %v465, %v464
        %v550 = vpack.c.b16 %v467, %v466
        %v551 = vpack.c.b16 %v469, %v468
        %v552 = vpack.c.b16 %v471, %v470
        %v553 = vpack.c.b16 %v473, %v472
        %v554 = vpack.c.b16 %v475, %v474
        %v555 = vpack.c.b16 %v477, %v476
        %v556 = vpack.c.b16 %v479, %v478
        %v557 = vpack.c.b16 %v481, %v480
        %v558 = vpack.c.b16 %v483, %v482
        %v559 = vpack.c.b16 %v485, %v484
        %v560 = vpack.c.b16 %v487, %v486
        %v561 = vpack.c.b16 %v489, %v488
        %v562 = vpack.c.b16 %v491, %v490
        %v563 = vpack.c.b16 %v493, %v492
        %v564 = vpack.c.b16 %v495, %v494
        %v565 = vpack.c.b16 %v497, %v496
        %v566 = vpack.c.b16 %v499, %v498
        %v567 = vpack.c.b16 %v501, %v500
        %v568 = vpack.c.b16 %v503, %v502
        %v569 = vpack.c.b16 %v505, %v504
        %v570 = vpack.c.b16 %v507, %v506
        %v571 = vpack.c.b16 %v509, %v508
        %v572 = vpack.c.b16 %v511, %v510
        %v573 = vpack.c.b16 %v513, %v512
        %v574 = vpack.c.b16 %v515, %v514
        %v575 = vpack.c.b16 %v517, %v516
        %v576 = vpack.c.b16 %v519, %v518
        %v577 = vpack.c.b16 %v521, %v520
        %v578 = vpack.c.b16 %v523, %v522
        %v579 = vpack.c.b16 %v525, %v524
        %v580 = vpack.c.b16 %v527, %v526
        %v581 = vpack.c.b16 %v529, %v528
        %v582 = vpack.c.b16 %v531, %v530
        %v583 = vpack.c.b16 %v533, %v532
        %v584 = vpack.c.b16 %v535, %v534
        %vm634 = vcmask 130048
        %v636 = vsel %vm634, %v237, 0
        %638 = vmatpush.bf16.msra.mxu0 %v543
        %639 = vmatpush.bf16.msra.mxu0 %v542
        %640 = vmatpush.bf16.msra.mxu0 %v541
        %641 = vmatpush.bf16.msra.mxu0 %v540
        %642 = vmatpush.bf16.msra.mxu0 %v539
        %643 = vmatpush.bf16.msra.mxu0 %v538
        %644 = vmatpush.bf16.msra.mxu0 %v537
        %645 = vmatpush.bf16.msra.mxu0 %v536
        %646 = vmatmul.bf16.gmra.mxu0 %v231
        %v647 = vpop.f32.mrf.mxu0
        %v648 = vadd.f32 %v338, %v647
        %v649 = vpop.f32.mrf.mxu0
        %650 = vdwg.mxu0
        %651 = vmatpush.bf16.msra.mxu0 %v551
        %652 = vmatpush.bf16.msra.mxu0 %v550
        %653 = vmatpush.bf16.msra.mxu0 %v549
        %654 = vmatpush.bf16.msra.mxu0 %v548
        %655 = vmatpush.bf16.msra.mxu0 %v547
        %656 = vmatpush.bf16.msra.mxu0 %v546
        %657 = vmatpush.bf16.msra.mxu0 %v545
        %658 = vmatpush.bf16.msra.mxu0 %v544
        %659 = vmatmul.bf16.gmra.mxu0 %v232
        %v660 = vpop.f32.mrf.mxu0
        %v661 = vadd.f32 %v648, %v660
        %v662 = vpop.f32.mrf.mxu0
        %663 = vdwg.mxu0
        %664 = vmatpush.bf16.msra.mxu0 %v559
        %665 = vmatpush.bf16.msra.mxu0 %v558
        %666 = vmatpush.bf16.msra.mxu0 %v557
        %667 = vmatpush.bf16.msra.mxu0 %v556
        %668 = vmatpush.bf16.msra.mxu0 %v555
        %669 = vmatpush.bf16.msra.mxu0 %v554
        %670 = vmatpush.bf16.msra.mxu0 %v553
        %671 = vmatpush.bf16.msra.mxu0 %v552
        %672 = vmatmul.bf16.gmra.mxu0 %v233
        %v673 = vpop.f32.mrf.mxu0
        %v674 = vadd.f32 %v661, %v673
        %v675 = vpop.f32.mrf.mxu0
        %676 = vdwg.mxu0
        %677 = vmatpush.bf16.msra.mxu0 %v567
        %678 = vmatpush.bf16.msra.mxu0 %v566
        %679 = vmatpush.bf16.msra.mxu0 %v565
        %680 = vmatpush.bf16.msra.mxu0 %v564
        %681 = vmatpush.bf16.msra.mxu0 %v563
        %682 = vmatpush.bf16.msra.mxu0 %v562
        %683 = vmatpush.bf16.msra.mxu0 %v561
        %684 = vmatpush.bf16.msra.mxu0 %v560
        %685 = vmatmul.bf16.gmra.mxu0 %v234
        %v686 = vpop.f32.mrf.mxu0
        %v687 = vadd.f32 %v674, %v686
        %v688 = vpop.f32.mrf.mxu0
        %689 = vdwg.mxu0
        %690 = vmatpush.bf16.msra.mxu0 %v575
        %691 = vmatpush.bf16.msra.mxu0 %v574
        %692 = vmatpush.bf16.msra.mxu0 %v573
        %693 = vmatpush.bf16.msra.mxu0 %v572
        %694 = vmatpush.bf16.msra.mxu0 %v571
        %695 = vmatpush.bf16.msra.mxu0 %v570
        %696 = vmatpush.bf16.msra.mxu0 %v569
        %697 = vmatpush.bf16.msra.mxu0 %v568
        %698 = vmatmul.bf16.gmra.mxu0 %v235
        %v699 = vpop.f32.mrf.mxu0
        %v700 = vadd.f32 %v687, %v699
        %v701 = vpop.f32.mrf.mxu0
        %702 = vdwg.mxu0
        %703 = vmatpush.bf16.msra.mxu0 %v583
        %704 = vmatpush.bf16.msra.mxu0 %v582
        %705 = vmatpush.bf16.msra.mxu0 %v581
        %706 = vmatpush.bf16.msra.mxu0 %v580
        %707 = vmatpush.bf16.msra.mxu0 %v579
        %708 = vmatpush.bf16.msra.mxu0 %v578
        %709 = vmatpush.bf16.msra.mxu0 %v577
        %710 = vmatpush.bf16.msra.mxu0 %v576
        %711 = vmatmul.bf16.gmra.mxu0 %v236
        %v712 = vpop.f32.mrf.mxu0
        %v713 = vadd.f32 %v700, %v712
        %v714 = vpop.f32.mrf.mxu0
        %715 = vdwg.mxu0
        %716 = vmatpush.bf16.msra.mxu0 0
        %717 = vmatpush.bf16.msra.mxu0 0
        %718 = vmatpush.bf16.msra.mxu0 0
        %719 = vmatpush.bf16.msra.mxu0 0
        %720 = vmatpush.bf16.msra.mxu0 0
        %721 = vmatpush.bf16.msra.mxu0 0
        %722 = vmatpush.bf16.msra.mxu0 0
        %723 = vmatpush.bf16.msra.mxu0 %v584
        %724 = vmatmul.bf16.gmra.mxu0 %v636
        %v725 = vpop.f32.mrf.mxu0
        %v726 = vadd.f32 %v713, %v725
        %v727 = vpop.f32.mrf.mxu0
        %728 = vdwg.mxu0
        %v729 = vmax.f32 %v726, 0.0
        %v730 = vpack.c.bf16 %v729, %v729
        %v731 = vld [vmem:[%s3] sm:$0xff]
        %v732 = vld [vmem:[%s3 + $0x8] sm:$0xff]
        %v733 = vld [vmem:[%s3 + $0x10] sm:$0xff]
        %v734 = vld [vmem:[%s3 + $0x18] sm:$0xf]
        %v735 = vld [vmem:[%s3 + $0x1c] sm:$0xff]
        %v736 = vld [vmem:[%s3 + $0x24] sm:$0xff]
        %v737 = vld [vmem:[%s3 + $0x2c] sm:$0xff]
        %v738 = vld [vmem:[%s3 + $0x34] sm:$0xf]
        %v739 = vld [vmem:[%s3 + $0x38] sm:$0xff]
        %v740 = vld [vmem:[%s3 + $0x40] sm:$0xff]
        %v741 = vld [vmem:[%s3 + $0x48] sm:$0xff]
        %v742 = vld [vmem:[%s3 + $0x50] sm:$0xf]
        %v743 = vld [vmem:[%s3 + $0x54] sm:$0xff]
        %v744 = vld [vmem:[%s3 + $0x5c] sm:$0xff]
        %v745 = vld [vmem:[%s3 + $0x64] sm:$0xff]
        %v746 = vld [vmem:[%s3 + $0x6c] sm:$0xf]
        %v747 = vld [vmem:[%s3 + $0x70] sm:$0xff]
        %v748 = vld [vmem:[%s3 + $0x78] sm:$0xff]
        %v749 = vld [vmem:[%s3 + $0x80] sm:$0xff]
        %v750 = vld [vmem:[%s3 + $0x88] sm:$0xf]
        %v751 = vld [vmem:[%s3 + $0x8c] sm:$0xff]
        %v752 = vld [vmem:[%s3 + $0x94] sm:$0xff]
        %v753 = vld [vmem:[%s3 + $0x9c] sm:$0xff]
        %v754 = vld [vmem:[%s3 + $0xa4] sm:$0xf]
        %v755 = vld [vmem:[%s3 + $0xa8] sm:$0xff]
        %v756 = vld [vmem:[%s3 + $0xb0] sm:$0xff]
        %v757 = vld [vmem:[%s3 + $0xb8] sm:$0xff]
        %v758 = vld [vmem:[%s3 + $0xc0] sm:$0xf]
        %v759 = vld [vmem:[%s3 + $0xc4] sm:$0xff]
        %v760 = vld [vmem:[%s3 + $0xcc] sm:$0xff]
        %v761 = vld [vmem:[%s3 + $0xd4] sm:$0xff]
        %v762 = vld [vmem:[%s3 + $0xdc] sm:$0xf]
        %v763 = vld [vmem:[%s4] sm:$0x7f]
        %v765 = vperm.slane %v763, 0
        %v766 = vperm.slane %v763, 1
        %v767 = vperm.slane %v763, 2
        %v768 = vperm.slane %v763, 3
        %v769 = vperm.slane %v763, 4
        %v770 = vperm.slane %v763, 5
        %v771 = vperm.slane %v763, 6
        %v811 = vunpack.c.l.b16 %v731
        %v812 = vunpack.c.h.b16 %v731
        %v813 = vunpack.c.l.b16 %v732
        %v814 = vunpack.c.h.b16 %v732
        %v815 = vunpack.c.l.b16 %v733
        %v816 = vunpack.c.h.b16 %v733
        %v817 = vunpack.c.l.b16 %v734
        %v818 = vunpack.c.l.b16 %v735
        %v819 = vunpack.c.h.b16 %v735
        %v820 = vunpack.c.l.b16 %v736
        %v821 = vunpack.c.h.b16 %v736
        %v822 = vunpack.c.l.b16 %v737
        %v823 = vunpack.c.h.b16 %v737
        %v824 = vunpack.c.l.b16 %v738
        %v825 = vunpack.c.l.b16 %v739
        %v826 = vunpack.c.h.b16 %v739
        %v827 = vunpack.c.l.b16 %v740
        %v828 = vunpack.c.h.b16 %v740
        %v829 = vunpack.c.l.b16 %v741
        %v830 = vunpack.c.h.b16 %v741
        %v831 = vunpack.c.l.b16 %v742
        %v832 = vunpack.c.l.b16 %v743
        %v833 = vunpack.c.h.b16 %v743
        %v834 = vunpack.c.l.b16 %v744
        %v835 = vunpack.c.h.b16 %v744
        %v836 = vunpack.c.l.b16 %v745
        %v837 = vunpack.c.h.b16 %v745
        %v838 = vunpack.c.l.b16 %v746
        %v839 = vunpack.c.l.b16 %v747
        %v840 = vunpack.c.h.b16 %v747
        %v841 = vunpack.c.l.b16 %v748
        %v842 = vunpack.c.h.b16 %v748
        %v843 = vunpack.c.l.b16 %v749
        %v844 = vunpack.c.h.b16 %v749
        %v845 = vunpack.c.l.b16 %v750
        %v846 = vunpack.c.l.b16 %v751
        %v847 = vunpack.c.h.b16 %v751
        %v848 = vunpack.c.l.b16 %v752
        %v849 = vunpack.c.h.b16 %v752
        %v850 = vunpack.c.l.b16 %v753
        %v851 = vunpack.c.h.b16 %v753
        %v852 = vunpack.c.l.b16 %v754
        %v853 = vunpack.c.l.b16 %v755
        %v854 = vunpack.c.h.b16 %v755
        %v855 = vunpack.c.l.b16 %v756
        %v856 = vunpack.c.h.b16 %v756
        %v857 = vunpack.c.l.b16 %v757
        %v858 = vunpack.c.h.b16 %v757
        %v859 = vunpack.c.l.b16 %v758
        %v860 = vunpack.c.l.b16 %v759
        %v861 = vunpack.c.h.b16 %v759
        %v862 = vunpack.c.l.b16 %v760
        %v863 = vunpack.c.h.b16 %v760
        %v864 = vunpack.c.l.b16 %v761
        %v865 = vunpack.c.h.b16 %v761
        %v866 = vunpack.c.l.b16 %v762
        %v867 = vpack.c.b16 %v818, %v811
        %v868 = vpack.c.b16 %v819, %v812
        %v869 = vpack.c.b16 %v820, %v813
        %v870 = vpack.c.b16 %v821, %v814
        %v871 = vpack.c.b16 %v822, %v815
        %v872 = vpack.c.b16 %v823, %v816
        %v873 = vpack.c.b16 %v824, %v817
        %v874 = vpack.c.b16 %v832, %v825
        %v875 = vpack.c.b16 %v833, %v826
        %v876 = vpack.c.b16 %v834, %v827
        %v877 = vpack.c.b16 %v835, %v828
        %v878 = vpack.c.b16 %v836, %v829
        %v879 = vpack.c.b16 %v837, %v830
        %v880 = vpack.c.b16 %v838, %v831
        %v881 = vpack.c.b16 %v846, %v839
        %v882 = vpack.c.b16 %v847, %v840
        %v883 = vpack.c.b16 %v848, %v841
        %v884 = vpack.c.b16 %v849, %v842
        %v885 = vpack.c.b16 %v850, %v843
        %v886 = vpack.c.b16 %v851, %v844
        %v887 = vpack.c.b16 %v852, %v845
        %v888 = vpack.c.b16 %v860, %v853
        %v889 = vpack.c.b16 %v861, %v854
        %v890 = vpack.c.b16 %v862, %v855
        %v891 = vpack.c.b16 %v863, %v856
        %v892 = vpack.c.b16 %v864, %v857
        %v893 = vpack.c.b16 %v865, %v858
        %v894 = vpack.c.b16 %v866, %v859
        %vm923 = vcmask 523264
        %v925 = vsel %vm923, %v730, 0
        %927 = vmatpush.bf16.msra.mxu0 0
        %928 = vmatpush.bf16.msra.mxu0 0
        %929 = vmatpush.bf16.msra.mxu0 0
        %930 = vmatpush.bf16.msra.mxu0 0
        %931 = vmatpush.bf16.msra.mxu0 %v888
        %932 = vmatpush.bf16.msra.mxu0 %v881
        %933 = vmatpush.bf16.msra.mxu0 %v874
        %934 = vmatpush.bf16.msra.mxu0 %v867
        %935 = vmatmul.bf16.gmra.mxu0 %v925
        %v936 = vpop.f32.mrf.mxu0
        %v937 = vadd.f32 %v765, %v936
        %v938 = vpop.f32.mrf.mxu0
        %939 = vdwg.mxu0
        %940 = vmatpush.bf16.msra.mxu0 0
        %941 = vmatpush.bf16.msra.mxu0 0
        %942 = vmatpush.bf16.msra.mxu0 0
        %943 = vmatpush.bf16.msra.mxu0 0
        %944 = vmatpush.bf16.msra.mxu0 %v889
        %945 = vmatpush.bf16.msra.mxu0 %v882
        %946 = vmatpush.bf16.msra.mxu0 %v875
        %947 = vmatpush.bf16.msra.mxu0 %v868
        %948 = vmatmul.bf16.gmra.mxu0 %v925
        %v949 = vpop.f32.mrf.mxu0
        %v950 = vadd.f32 %v766, %v949
        %v951 = vpop.f32.mrf.mxu0
        %952 = vdwg.mxu0
        %953 = vmatpush.bf16.msra.mxu0 0
        %954 = vmatpush.bf16.msra.mxu0 0
        %955 = vmatpush.bf16.msra.mxu0 0
        %956 = vmatpush.bf16.msra.mxu0 0
        %957 = vmatpush.bf16.msra.mxu0 %v890
        %958 = vmatpush.bf16.msra.mxu0 %v883
        %959 = vmatpush.bf16.msra.mxu0 %v876
        %960 = vmatpush.bf16.msra.mxu0 %v869
        %961 = vmatmul.bf16.gmra.mxu0 %v925
        %v962 = vpop.f32.mrf.mxu0
        %v963 = vadd.f32 %v767, %v962
        %v964 = vpop.f32.mrf.mxu0
        %965 = vdwg.mxu0
        %966 = vmatpush.bf16.msra.mxu0 0
        %967 = vmatpush.bf16.msra.mxu0 0
        %968 = vmatpush.bf16.msra.mxu0 0
        %969 = vmatpush.bf16.msra.mxu0 0
        %970 = vmatpush.bf16.msra.mxu0 %v891
        %971 = vmatpush.bf16.msra.mxu0 %v884
        %972 = vmatpush.bf16.msra.mxu0 %v877
        %973 = vmatpush.bf16.msra.mxu0 %v870
        %974 = vmatmul.bf16.gmra.mxu0 %v925
        %v975 = vpop.f32.mrf.mxu0
        %v976 = vadd.f32 %v768, %v975
        %v977 = vpop.f32.mrf.mxu0
        %978 = vdwg.mxu0
        %979 = vmatpush.bf16.msra.mxu0 0
        %980 = vmatpush.bf16.msra.mxu0 0
        %981 = vmatpush.bf16.msra.mxu0 0
        %982 = vmatpush.bf16.msra.mxu0 0
        %983 = vmatpush.bf16.msra.mxu0 %v892
        %984 = vmatpush.bf16.msra.mxu0 %v885
        %985 = vmatpush.bf16.msra.mxu0 %v878
        %986 = vmatpush.bf16.msra.mxu0 %v871
        %987 = vmatmul.bf16.gmra.mxu0 %v925
        %v988 = vpop.f32.mrf.mxu0
        %v989 = vadd.f32 %v769, %v988
        %v990 = vpop.f32.mrf.mxu0
        %991 = vdwg.mxu0
        %992 = vmatpush.bf16.msra.mxu0 0
        %993 = vmatpush.bf16.msra.mxu0 0
        %994 = vmatpush.bf16.msra.mxu0 0
        %995 = vmatpush.bf16.msra.mxu0 0
        %996 = vmatpush.bf16.msra.mxu0 %v893
        %997 = vmatpush.bf16.msra.mxu0 %v886
        %998 = vmatpush.bf16.msra.mxu0 %v879
        %999 = vmatpush.bf16.msra.mxu0 %v872
        %1000 = vmatmul.bf16.gmra.mxu0 %v925
        %v1001 = vpop.f32.mrf.mxu0
        %v1002 = vadd.f32 %v770, %v1001
        %v1003 = vpop.f32.mrf.mxu0
        %1004 = vdwg.mxu0
        %1005 = vmatpush.bf16.msra.mxu0 0
        %1006 = vmatpush.bf16.msra.mxu0 0
        %1007 = vmatpush.bf16.msra.mxu0 0
        %1008 = vmatpush.bf16.msra.mxu0 0
        %1009 = vmatpush.bf16.msra.mxu0 %v894
        %1010 = vmatpush.bf16.msra.mxu0 %v887
        %1011 = vmatpush.bf16.msra.mxu0 %v880
        %1012 = vmatpush.bf16.msra.mxu0 %v873
        %1013 = vmatmul.bf16.gmra.mxu0 %v925
        %v1014 = vpop.f32.mrf.mxu0
        %v1015 = vadd.f32 %v771, %v1014
        %v1016 = vpop.f32.mrf.mxu0
        %1017 = vdwg.mxu0
        %v1018 = vmax.f32 %v937, %v989
        %v1019 = vmax.f32 %v950, %v1002
        %v1020 = vsel %vm634, %v1015, -inf
        %v1021 = vmax.f32 %v963, %v1020
        %v1022 = vmax.f32 %v1018, %v1019
        %v1023 = vmax.f32 %v1021, %v976
        %v1024 = vmax.f32 %v1022, %v1023
        %1025 = vmax.xlane.f32.xlu0 %v1024
        %v1026 = vpop.xlane.xlu0 %1025
        %v1027 = vsub.f32 %v937, %v1026
        %v1028 = vsub.f32 %v950, %v1026
        %v1029 = vsub.f32 %v963, %v1026
        %v1030 = vsub.f32 %v976, %v1026
        %v1031 = vsub.f32 %v989, %v1026
        %v1032 = vsub.f32 %v1002, %v1026
        %v1033 = vsub.f32 %v1015, %v1026
        %v1034 = vmul.f32 %v1027, 1.442695
        %v1035 = vpow.pop %v1034
        %v1036 = vmul.f32 %v1028, 1.442695
        %v1037 = vpow.pop %v1036
        %v1038 = vmul.f32 %v1029, 1.442695
        %v1039 = vpow.pop %v1038
        %v1040 = vmul.f32 %v1030, 1.442695
        %v1041 = vpow.pop %v1040
        %v1042 = vmul.f32 %v1031, 1.442695
        %v1043 = vpow.pop %v1042
        %v1044 = vmul.f32 %v1032, 1.442695
        %v1045 = vpow.pop %v1044
        %v1046 = vmul.f32 %v1033, 1.442695
        %v1047 = vpow.pop %v1046
        %v1048 = vadd.f32 %v1035, %v1037
        %v1049 = vadd.f32 %v1048, %v1039
        %v1050 = vadd.f32 %v1049, %v1041
        %v1051 = vadd.f32 %v1050, %v1043
        %v1052 = vadd.f32 %v1051, %v1045
        %v1053 = vsel %vm634, %v1047, 0.0
        %v1054 = vadd.f32 %v1052, %v1053
        %1055 = vadd.xlane.f32.xlu0 %v1054
        %v1056 = vpop.xlane.xlu0 %1055
        %v1057 = vrcp.pop %v1056
        %v1058 = vmul.f32 %v1056, %v1057
        %v1059 = vsub.f32 1.0, %v1058
        %v1060 = vmul.f32 %v1057, %v1059
        %v1061 = vadd.f32 %v1057, %v1060
        %vm1062 = vweird.f32 %v1056
        %vm1063 = vweird.f32 %v1057
        %vm1064 = vmor %vm1062, %vm1063
        %v1065 = vsel %vm1064, %v1057, %v1061
        %v1066 = vand.u32 2147483647, %v1056
        %vm1067 = vcmp.eq.f32.partialorder %v1066, 8.507059e+37
        %v1068 = vand.u32 %v1056, 2147483648
        %v1069 = vor.u32 1.1754944e-38, %v1068
        %v1070 = vsel %vm1067, %v1069, %v1065
        %v1071 = vmul.f32 %v1035, %v1070
        %v1072 = vmul.f32 %v1037, %v1070
        %v1073 = vmul.f32 %v1039, %v1070
        %v1074 = vmul.f32 %v1041, %v1070
        %v1075 = vmul.f32 %v1043, %v1070
        %v1076 = vmul.f32 %v1045, %v1070
        %v1077 = vmul.f32 %v1047, %v1070
        %1078 = vst [vmem:[%s217] sm:$0xff] %v1071
        %1079 = vst [vmem:[%s217 + $0x8] sm:$0xff] %v1072
        %1080 = vst [vmem:[%s217 + $0x10] sm:$0xff] %v1073
        %1081 = vst [vmem:[%s217 + $0x18] sm:$0xff] %v1074
        %1082 = vst [vmem:[%s217 + $0x20] sm:$0xff] %v1075
        %1083 = vst [vmem:[%s217 + $0x28] sm:$0xff] %v1076
        %1084 = vst.msk [vmem:[%s217 + $0x30] sm:$0xff] %vm634, %v1077
        %s1085 = sand.u32 %s137, 1
        %s1086 = scalar_lea.sflag [#allocation3], %s1085
        %s1087 = sand.u32 %s137, 1
        %s1088 = smul.addr %s1087, 56
        %s1089 = scalar_lea.vmem [#allocation2], %s1088
        // Predicated region
        $region41: #{onesingle_forward.1} parent=39 // pred_check
          %p1090 = pneg %p147
        $region42: #{onesingle_forward.1} parent=39 // pred_check_branch
          %1092 = sbr.rel (%p1090) target = $region44
        $region43: #{onesingle_forward.1} parent=39 // pred_region
          %1094 = vsyncadd %s1086, 0
          %s1095 = smul.addr %s19, 7
          %s1096 = smul.addr %s1095, 8
          %s1097 = scalar_lea.hbm %s5, %s1096
          %s1099 = sshll.u32 %s1089, 4
          %s1100 = int_to_ptr.vmem [resolvable:$true] %s1099
          %s1101 = sshll.u32 %s1097, 4
          %s1102 = int_to_ptr.hbm [resolvable:$true] %s1101
          %1104 = dma.vmem_to_hbm [thread:$0]  %s1100, 896, %s1102, %s1086
        $region44: #{onesingle_forward.1} parent=39 // pred_fallthru
          _
      $region40: #{onesingle_forward.1} parent=5 // pred_fallthru
        _
      %p1105 = scmp.le.s32.totalorder 2, %s14
      // Predicated region
      $region45: #{onesingle_forward.1} parent=5 // pred_check
        %p1106 = pneg %p1105
      $region46: #{onesingle_forward.1} parent=5 // pred_check_branch
        %1108 = sbr.rel (%p1106) target = $region48
      $region47: #{onesingle_forward.1} parent=5 // pred_region
        %s1109 = ssub.s32 %s14, 2
        // Predicated region
        $region49: #{onesingle_forward.1} parent=47 // pred_check
          %p1110 = pneg %p153
        $region50: #{onesingle_forward.1} parent=47 // pred_check_branch
          %1112 = sbr.rel (%p1110) target = $region52
        $region51: #{onesingle_forward.1} parent=47 // pred_region
          %s1113 = sand.u32 %s138, 1
          %s1114 = scalar_lea.sflag [#allocation3], %s1113
          %s1115 = sand.u32 %s138, 1
          %s1116 = smul.addr %s1115, 56
          %s1117 = scalar_lea.vmem [#allocation2], %s1116
          %1119 = dma.done %s1114, 896
        $region52: #{onesingle_forward.1} parent=47 // pred_fallthru
          _
      $region48: #{onesingle_forward.1} parent=5 // pred_fallthru
        _
    $region6: #{onesingle_forward.1} parent=1 // loop_footer
      %s18 = sadd.s32 1, %s14
    $region7: #{onesingle_forward.1} parent=1 // loop_footer_branch
      %13 = sbr.rel target = $region3
    $region8: #{onesingle_forward.1} parent=1 // loop_exit
      _
    %1120 = vsyncpa [#allocation3], 1
    %s1121 = scalar_lea.sflag [#allocation3], 1
    %1122 = vsyncpa %s1121, 1

</llo_original>
